<compile_context>
chip_gen: v7x
topology: tpu7x:2x2x1
jax: 0.10.0
libtpu: 0.0.40
codegen_flags: <defaults>
</compile_context>

<pallas_src>
import numpy as np
import jax
import jax.numpy as jnp
from jax.experimental import pallas as pl
from jax.experimental.pallas import tpu as pltpu


def _dma_copy_kernel(x_ref, o_ref):
    """Single HBM->HBM DMA of the selected tensor (whole-array copy)."""
    def body(sem):
        cp = pltpu.make_async_copy(x_ref, o_ref, sem)
        cp.start()
        cp.wait()
    pl.run_scoped(body, pltpu.SemaphoreType.DMA(()))


def _pallas_identity_copy(x):
    """Stream `x` through one HBM->HBM DMA inside a pallas_call."""
    squeeze_back = False
    if x.ndim == 0:
        x = x.reshape((1,))          # give the DMA a 1-D ref for 0-d inputs
        squeeze_back = True

    out = pl.pallas_call(
        _dma_copy_kernel,
        out_shape=jax.ShapeDtypeStruct(x.shape, x.dtype),
        in_specs=[pl.BlockSpec(memory_space=pl.ANY)],   # raw HBM ref, no auto-DMA
        out_specs=pl.BlockSpec(memory_space=pl.ANY),    # output stays in HBM
    )(x)

    if squeeze_back:
        out = out.reshape(())
    return out


def choice(*xs, idx=0, materialize=True):
    """Functional Choice: returns xs[idx].

    materialize=True  -> the selected tensor is copied into a fresh buffer via
                         a single Pallas HBM->HBM DMA (one read + one write).
    materialize=False -> returns xs[idx] directly (zero cost; matches the
                         PyTorch module, which aliases rather than copies).
    """
    # Mirror decorator_tuple_to_args: choice((a, b, c)) == choice(a, b, c).
    if len(xs) == 1 and isinstance(xs[0], (tuple, list)):
        xs = tuple(xs[0])
    x = xs[idx]
    if not materialize:
        return x
    return _pallas_identity_copy(x)


class Choice:
    """Module-style wrapper matching the PyTorch class."""

    def __init__(self, idx=0, materialize=True):
        self.idx = idx
        self.materialize = materialize

    def __call__(self, *xs):
        return choice(*xs, idx=self.idx, materialize=self.materialize)


if __name__ == "__main__":
    key = jax.random.PRNGKey(0)
    k0, k1, k2, k3 = jax.random.split(key, 4)

    # Small NCHW candidates: batch=2, channels=4, spatial=16x16.
    shape = (2, 4, 16, 16)
    x0 = jax.random.normal(k0, shape, dtype=jnp.float32)
    x1 = jax.random.normal(k1, shape, dtype=jnp.float32)
    x2 = jax.random.normal(k2, shape, dtype=jnp.float32)

    # Choice(idx=1) over varargs -> runs the Pallas DMA kernel.
    m = Choice(idx=1)
    y = jax.block_until_ready(m(x0, x1, x2))
    np.testing.assert_allclose(np.asarray(y), np.asarray(x1), rtol=0, atol=0)

    # decorator_tuple_to_args path: a single tuple argument is unpacked.
    y_tuple = jax.block_until_ready(Choice(idx=0)((x0, x1, x2)))
    np.testing.assert_allclose(np.asarray(y_tuple), np.asarray(x0), rtol=0, atol=0)

    # Non-lane-aligned shape (2*3*7*7 = 294): no padding / slicing needed —
    # the whole-array DMA handles arbitrary shapes directly.
    x_odd_a = jax.random.normal(k3, (2, 3, 7, 7), dtype=jnp.float32)
    x_odd_b = x_odd_a * 2.0
    y_odd = jax.block_until_ready(choice(x_odd_a, x_odd_b, idx=1))
    np.testing.assert_allclose(np.asarray(y_odd), np.asarray(x_odd_b), rtol=0, atol=0)

    # bf16 path: dtype-native byte copy, no promotion.
    xb0 = x0.astype(jnp.bfloat16)
    xb1 = x1.astype(jnp.bfloat16)
    y_bf16 = jax.block_until_ready(choice(xb0, xb1, idx=0))
    np.testing.assert_allclose(np.asarray(y_bf16, dtype=np.float32),
                               np.asarray(xb0, dtype=np.float32), rtol=0, atol=0)

    # Zero-copy fast path (perf feedback #1): Choice is a static select,
    # so when no fresh buffer is needed, it is free.
    y_alias = choice(x0, x1, x2, idx=2, materialize=False)
    assert y_alias is x2

    print("KERNEL_OK")
</pallas_src>

<mosaic_0001>
module attributes {stable_mosaic.version = 11 : i64} {
  func.func @_dma_copy_kernel(%arg0: memref<2x4x16x16xf32, #tpu.memory_space<any>>, %arg1: memref<2x4x16x16xf32, #tpu.memory_space<any>>) attributes {dimension_semantics = [], scalar_prefetch = 0 : i64, scratch_operands = 0 : i64, tpu.core_type = #tpu.core_type<tc>} {
    "tpu.region"() ({
      %0 = tpu.sem_alloc : memref<!tpu.dma_semaphore, #tpu.memory_space<semaphore_mem>>
      tpu.enqueue_dma source(%arg0 : memref<2x4x16x16xf32, #tpu.memory_space<any>>) target(%arg1 : memref<2x4x16x16xf32, #tpu.memory_space<any>>) target_semaphore(%0 : memref<!tpu.dma_semaphore, #tpu.memory_space<semaphore_mem>>)
      tpu.wait_dma2 semaphore(%0 : memref<!tpu.dma_semaphore, #tpu.memory_space<semaphore_mem>>) src(%arg0 : memref<2x4x16x16xf32, #tpu.memory_space<any>>) dst(%arg1 : memref<2x4x16x16xf32, #tpu.memory_space<any>>)
      tpu.yield
    }) : () -> ()
    return
  }
}

</mosaic_0001>

<llo_original>
// kernel: tpu_custom_call.1
$region0: #{tpu_custom_call.1}
  #allocation0 [shape = 'u32[]', space=smem, size = 0x4, offset = 0x4, fixed_abs, tag = 'smem constant byte address 0x4 - core index']
  #allocation1 [shape = 'u32[144,128]{1,0:T(1,128)}', space=vmem, size = 0x12000, scoped, tag = 'internal scratch']
  #allocation3 [shape = 's32[]', space=sflag, size = 0x4, offset = 0, fixed_abs, tag = 'sflag constant byte address 0x0 - dummy sync flag']
  #allocation4 [shape = 'u32[0]{0}', space=smem, size = 0, offset = 0, fixed_abs, tag = 'smem constant byte address 0x0 - null']
  %s0 = inlined_call_operand.hbm [shape: f32[2,4,16,16], index: 0, kind: input, shape index: {}]
  %s1 = inlined_call_operand.hbm [shape: f32[2,4,16,16], index: 1, kind: output, shape index: {}]
  %s2 = sld [smem:[#allocation0]]
  $region3: #{tpu_custom_call.1} parent=0
    _
  %s4 = ssub.s32 1, %s2
  %s5 = scalar_select 0, %s4, %s2
  $region2: #{tpu_custom_call.1} parent=0
    #allocation2 [shape = 's32[1]{0}', space=sflag, size = 0x4, scoped, tag = 'scoped memory for tpu_custom_call.1']
    %s7 = sshll.u32 1, 14
    %s8 = sxor.u32 4294967295, %s7
    %s11 = sshll.u32 3, 24
    %s12 = sxor.u32 4294967295, %s11
    %s13 = sand.u32 0, %s12
    %s15 = sor.u32 %s13, 0
    %18 = dma.general %s0, 2048, %s1, [#allocation2], [#allocation3], [#allocation4], %s15, 0
    %s19 = smul.u32 2, 4
    %s20 = smul.u32 %s19, 16
    %s21 = smul.u32 %s20, 1
    %s22 = sshll.u32 %s21, 4
    %23 = dma.done [#allocation2], %s22

</llo_original>
